<compile_context>
chip_gen: v6e
topology: v6e:2x2x1
jax: 0.10.0
libtpu: 0.0.40
codegen_flags: <defaults>
</compile_context>

<pallas_src>
import functools
import math

import jax
import jax.numpy as jnp
from jax.experimental import pallas as pl
from jax.experimental.pallas import tpu as pltpu

EMBED_DIM = 768
DEPTH = 12
NUM_HEADS = 12
MLP_RATIO = 4.0
LABEL_DIM = 10


# --------------------------------------------------------------------------
# Pallas fused multi-head attention (mask-free, flash-style, ctx-only output)
# --------------------------------------------------------------------------
def _mha_kernel(q_ref, k_ref, v_ref, o_ref, *, scale, head_group):
    # q_ref: (HG, TQ, D)   k_ref/v_ref: (HG, Sk, D)   o_ref: (TQ, HG*D)
    ctxs = []
    for h in range(head_group):            # static unroll (HG == 2)
        q = q_ref[h]                        # (TQ, D), input dtype (no upcast)
        k = k_ref[h]                        # (Sk, D)
        v = v_ref[h]                        # (Sk, D)
        # q @ k^T without materializing a transpose of K: contract dim 1 vs dim 1.
        s = jax.lax.dot_general(
            q, k,
            dimension_numbers=(((1,), (1,)), ((), ())),
            preferred_element_type=jnp.float32,
        ) * scale                           # (TQ, Sk) f32
        m = jnp.max(s, axis=-1, keepdims=True)
        e = jnp.exp(s - m)
        denom = jnp.sum(e, axis=-1, keepdims=True)
        p = e * pl.reciprocal(denom, approx=False)          # exact softmax
        ctx = jnp.dot(p.astype(v.dtype), v, preferred_element_type=jnp.float32)
        ctxs.append(ctx)                    # (TQ, D) f32
    out = ctxs[0] if head_group == 1 else jnp.concatenate(ctxs, axis=-1)
    o_ref[...] = out.astype(o_ref.dtype)    # single lane-dense (TQ, HG*D) store


def _round_up(x, m):
    return (x + m - 1) // m * m


def flash_mha(q, k, v, *, scale=None, q_tile=128):
    """Fused MHA.  q, k, v: (B, H, S, D).

    Returns the context already laid out as (B, S, H*D), i.e.
    `(softmax(q @ k^T * scale) @ v).transpose(1, 2).reshape(B, S, C)`.
    """
    B, H, S, D = q.shape
    assert k.shape == (B, H, S, D) and v.shape == (B, H, S, D)
    assert q_tile % 8 == 0 and q_tile > 0
    # Two heads are packed per grid step so the output block is 128 lanes wide.
    assert H % 2 == 0 and D % 64 == 0, "kernel expects even num_heads and D % 64 == 0"
    if scale is None:
        scale = 1.0 / math.sqrt(D)

    head_group = 2
    num_hblocks = H // head_group
    tq = min(q_tile, _round_up(S, 8))
    sp = _round_up(S, tq)
    if sp != S:
        # Only queries are padded; K/V keep the true length, so the softmax
        # denominator never sees padded keys and no mask is required.
        q = jnp.pad(q, ((0, 0), (0, 0), (0, sp - S), (0, 0)))
    num_qblocks = sp // tq
    C = H * D

    kernel = functools.partial(_mha_kernel, scale=float(scale), head_group=head_group)

    out = pl.pallas_call(
        kernel,
        out_shape=jax.ShapeDtypeStruct((B, sp, C), q.dtype),
        grid_spec=pltpu.PrefetchScalarGridSpec(
            num_scalar_prefetch=0,
            grid=(B, num_hblocks, num_qblocks),
            in_specs=[
                pl.BlockSpec((pl.Squeezed(), head_group, tq, D),
                             lambda b, h, j: (b, h, j, 0)),
                pl.BlockSpec((pl.Squeezed(), head_group, S, D),
                             lambda b, h, j: (b, h, 0, 0)),
                pl.BlockSpec((pl.Squeezed(), head_group, S, D),
                             lambda b, h, j: (b, h, 0, 0)),
            ],
            out_specs=pl.BlockSpec((pl.Squeezed(), tq, head_group * D),
                                   lambda b, h, j: (b, j, h)),
        ),
        compiler_params=pltpu.CompilerParams(
            dimension_semantics=("parallel", "parallel", "parallel"),
            vmem_limit_bytes=32 * 1024 * 1024,
        ),
    )(q, k, v)

    return out[:, :S, :]


# --------------------------------------------------------------------------
# ASTModel forward (plain JAX around the Pallas attention core)
# --------------------------------------------------------------------------
def _linear(x, w, b):
    # torch nn.Linear: y = x @ W^T + b  with W of shape (out_features, in_features)
    y = jnp.dot(x, w.T)
    if b is not None:
        y = y + b
    return y


def _layer_norm(x, gamma, beta, eps):
    mu = jnp.mean(x, axis=-1, keepdims=True)
    var = jnp.mean(jnp.square(x - mu), axis=-1, keepdims=True)
    return (x - mu) * jax.lax.rsqrt(var + eps) * gamma + beta


def _attention(x, p, *, num_heads, use_pallas, q_tile):
    B, N, C = x.shape
    D = C // num_heads
    scale = D ** -0.5                                   # qk_scale=None -> head_dim**-0.5
    qkv = _linear(x, p["qkv_w"], p["qkv_b"])            # (B, N, 3C)
    qkv = qkv.reshape(B, N, 3, num_heads, D).transpose(2, 0, 3, 1, 4)
    q, k, v = qkv[0], qkv[1], qkv[2]                    # (B, H, N, D)
    if use_pallas:
        ctx = flash_mha(q, k, v, scale=scale, q_tile=q_tile)        # (B, N, C)
    else:  # pure-JAX reference path (same math, used only for verification)
        attn = jnp.einsum("bhqd,bhkd->bhqk", q, k,
                          precision=jax.lax.Precision.HIGHEST) * scale
        attn = jax.nn.softmax(attn, axis=-1)
        ctx = jnp.einsum("bhqk,bhkd->bhqd", attn, v,
                         precision=jax.lax.Precision.HIGHEST)
        ctx = ctx.transpose(0, 2, 1, 3).reshape(B, N, C)
    # attn_drop / proj_drop have p = 0.0 -> identity
    return _linear(ctx, p["proj_w"], p["proj_b"])


def _mlp(x, p):
    x = _linear(x, p["fc1_w"], p["fc1_b"])
    x = jax.nn.gelu(x, approximate=False)               # nn.GELU (exact)
    return _linear(x, p["fc2_w"], p["fc2_b"])


def _block(x, p, *, num_heads, use_pallas, q_tile):
    x = x + _attention(_layer_norm(x, p["norm1_w"], p["norm1_b"], 1e-6), p,
                       num_heads=num_heads, use_pallas=use_pallas, q_tile=q_tile)
    x = x + _mlp(_layer_norm(x, p["norm2_w"], p["norm2_b"], 1e-6), p)
    return x


def _patch_embed(x, w, b):
    # Conv2d(1, embed_dim, kernel_size=(16,16), stride=(10,10)) -> flatten(2).transpose(1,2)
    y = jax.lax.conv_general_dilated(
        x, w, window_strides=(10, 10), padding="VALID",
        dimension_numbers=("NCHW", "OIHW", "NCHW"))
    y = y + b[None, :, None, None]
    B, C, Hp, Wp = y.shape
    return y.reshape(B, C, Hp * Wp).transpose(0, 2, 1)   # (B, num_patches, C)


def ast_forward(params, x, *, num_heads=NUM_HEADS, use_pallas=True, q_tile=128):
    # x: (B, T, F) spectrogram-like input
    x = jnp.concatenate([x, x, x[:, :64]], axis=1)
    x = jnp.concatenate([x, x], axis=-1)
    x = x[:, None, :, :]                                 # unsqueeze(1)
    x = jnp.swapaxes(x, 2, 3)                            # transpose(2, 3)
    B = x.shape[0]
    x = _patch_embed(x, params["patch_w"], params["patch_b"])
    cls = jnp.broadcast_to(params["cls_token"], (B, 1, x.shape[-1]))
    dist = jnp.broadcast_to(params["dist_token"], (B, 1, x.shape[-1]))
    x = jnp.concatenate([cls, dist, x], axis=1)
    x = x + params["pos_embed"]
    # pos_drop has p = 0.0 -> identity

    def body(carry, bp):
        return _block(carry, bp, num_heads=num_heads,
                      use_pallas=use_pallas, q_tile=q_tile), None

    x, _ = jax.lax.scan(body, x, params["blocks"])
    x = _layer_norm(x, params["norm_w"], params["norm_b"], 1e-6)
    x = (x[:, 0] + x[:, 1]) / 2
    x = _layer_norm(x, params["fc_norm_w"], params["fc_norm_b"], 1e-5)
    return _linear(x, params["head_w"], params["head_b"])


def init_params(key, *, num_tokens, embed_dim=EMBED_DIM, depth=DEPTH,
                mlp_ratio=MLP_RATIO, label_dim=LABEL_DIM):
    hidden = int(embed_dim * mlp_ratio)
    keys = jax.random.split(key, 9)

    def nrm(k, shape, std=0.02):
        return (std * jax.random.normal(k, shape)).astype(jnp.float32)

    blocks = {
        "norm1_w": jnp.ones((depth, embed_dim), jnp.float32),
        "norm1_b": jnp.zeros((depth, embed_dim), jnp.float32),
        "qkv_w": nrm(keys[0], (depth, 3 * embed_dim, embed_dim)),
        "qkv_b": jnp.zeros((depth, 3 * embed_dim), jnp.float32),
        "proj_w": nrm(keys[1], (depth, embed_dim, embed_dim)),
        "proj_b": jnp.zeros((depth, embed_dim), jnp.float32),
        "norm2_w": jnp.ones((depth, embed_dim), jnp.float32),
        "norm2_b": jnp.zeros((depth, embed_dim), jnp.float32),
        "fc1_w": nrm(keys[2], (depth, hidden, embed_dim)),
        "fc1_b": jnp.zeros((depth, hidden), jnp.float32),
        "fc2_w": nrm(keys[3], (depth, embed_dim, hidden)),
        "fc2_b": jnp.zeros((depth, embed_dim), jnp.float32),
    }
    return {
        "patch_w": nrm(keys[4], (embed_dim, 1, 16, 16)),
        "patch_b": jnp.zeros((embed_dim,), jnp.float32),
        "cls_token": nrm(keys[5], (1, 1, embed_dim)),
        "dist_token": nrm(keys[6], (1, 1, embed_dim)),
        # NOTE: the original hard-codes 1212 patches (its production input size);
        # here pos_embed is sized for the demo input's token count.
        "pos_embed": nrm(keys[7], (1, num_tokens, embed_dim)),
        "blocks": blocks,
        "norm_w": jnp.ones((embed_dim,), jnp.float32),
        "norm_b": jnp.zeros((embed_dim,), jnp.float32),
        "fc_norm_w": jnp.ones((embed_dim,), jnp.float32),
        "fc_norm_b": jnp.zeros((embed_dim,), jnp.float32),
        "head_w": nrm(keys[8], (label_dim, embed_dim)),
        "head_b": jnp.zeros((label_dim,), jnp.float32),
    }


if __name__ == "__main__":
    key = jax.random.PRNGKey(0)
    k_inp, k_q, k_k, k_v, k_params = jax.random.split(key, 5)

    # ---- 1) standalone check of the Pallas attention kernel ----------------
    B, H, S, D = 2, 4, 38, 64          # non-multiple-of-8 seq exercises q padding + tiling
    q = jax.random.normal(k_q, (B, H, S, D), dtype=jnp.float32)
    k = jax.random.normal(k_k, (B, H, S, D), dtype=jnp.float32)
    v = jax.random.normal(k_v, (B, H, S, D), dtype=jnp.float32)
    scale = D ** -0.5
    ctx = flash_mha(q, k, v, scale=scale, q_tile=16)
    jax.block_until_ready(ctx)

    attn = jax.nn.softmax(
        jnp.einsum("bhqd,bhkd->bhqk", q, k,
                   precision=jax.lax.Precision.HIGHEST) * scale, axis=-1)
    ctx_ref = jnp.einsum("bhqk,bhkd->bhqd", attn, v,
                         precision=jax.lax.Precision.HIGHEST)
    ctx_ref = ctx_ref.transpose(0, 2, 1, 3).reshape(B, S, H * D)
    assert jnp.allclose(ctx, ctx_ref, atol=1e-3, rtol=1e-3), (
        float(jnp.max(jnp.abs(ctx - ctx_ref))))

    # ---- 2) end-to-end ASTModel forward at small input size ----------------
    Bm, T, Fr = 2, 64, 16              # -> 36 patches + cls + dist = 38 tokens
    x = jax.random.normal(k_inp, (Bm, T, Fr), dtype=jnp.float32)

    time_cat = 2 * T + min(T, 64)      # after cat([x, x, x[:, :64]], dim=1)
    freq_cat = 2 * Fr                  # after cat([x, x], dim=-1)
    hp = (freq_cat - 16) // 10 + 1
    wp = (time_cat - 16) // 10 + 1
    num_tokens = hp * wp + 2

    params = init_params(k_params, num_tokens=num_tokens)

    fwd = jax.jit(functools.partial(ast_forward, use_pallas=True, q_tile=16))
    fwd_ref = jax.jit(functools.partial(ast_forward, use_pallas=False, q_tile=16))

    logits = fwd(params, x)
    jax.block_until_ready(logits)
    logits_ref = fwd_ref(params, x)
    jax.block_until_ready(logits_ref)

    assert logits.shape == (Bm, LABEL_DIM)
    assert jnp.allclose(logits, logits_ref, atol=2e-3, rtol=2e-3), (
        float(jnp.max(jnp.abs(logits - logits_ref))))

    print("KERNEL_OK")
</pallas_src>

<mosaic_0001>
module attributes {stable_mosaic.version = 11 : i64} {
  func.func @_mha_kernel(%arg0: i32, %arg1: i32, %arg2: i32, %arg3: memref<1x2x16x64xf32, #tpu.memory_space<vmem>>, %arg4: memref<1x2x38x64xf32, #tpu.memory_space<vmem>>, %arg5: memref<1x2x38x64xf32, #tpu.memory_space<vmem>>, %arg6: memref<1x16x128xf32, #tpu.memory_space<vmem>>) attributes {dimension_semantics = [#tpu.dimension_semantics<parallel>, #tpu.dimension_semantics<parallel>, #tpu.dimension_semantics<parallel>], iteration_bounds = array<i64: 2, 2, 3>, scalar_prefetch = 0 : i64, scratch_operands = 0 : i64, tpu.core_type = #tpu.core_type<tc>, window_params = [{transform_indices = @transform_0, window_bounds = array<i64: 1, 2, 16, 64>}, {transform_indices = @transform_1, window_bounds = array<i64: 1, 2, 38, 64>}, {transform_indices = @transform_2, window_bounds = array<i64: 1, 2, 38, 64>}, {transform_indices = @transform_3, window_bounds = array<i64: 1, 16, 128>}]} {
    %c0 = arith.constant 0 : index
    %c0_0 = arith.constant 0 : index
    %c0_1 = arith.constant 0 : index
    %c0_2 = arith.constant 0 : index
    %0 = vector.load %arg3[%c0, %c0_0, %c0_1, %c0_2] : memref<1x2x16x64xf32, #tpu.memory_space<vmem>>, vector<1x1x16x64xf32>
    %1 = vector.shape_cast %0 : vector<1x1x16x64xf32> to vector<16x64xf32>
    %c0_3 = arith.constant 0 : index
    %c0_4 = arith.constant 0 : index
    %c0_5 = arith.constant 0 : index
    %c0_6 = arith.constant 0 : index
    %2 = vector.load %arg4[%c0_3, %c0_4, %c0_5, %c0_6] : memref<1x2x38x64xf32, #tpu.memory_space<vmem>>, vector<1x1x38x64xf32>
    %3 = vector.shape_cast %2 : vector<1x1x38x64xf32> to vector<38x64xf32>
    %c0_7 = arith.constant 0 : index
    %c0_8 = arith.constant 0 : index
    %c0_9 = arith.constant 0 : index
    %c0_10 = arith.constant 0 : index
    %4 = vector.load %arg5[%c0_7, %c0_8, %c0_9, %c0_10] : memref<1x2x38x64xf32, #tpu.memory_space<vmem>>, vector<1x1x38x64xf32>
    %5 = vector.shape_cast %4 : vector<1x1x38x64xf32> to vector<38x64xf32>
    %cst = arith.constant dense<0.000000e+00> : vector<16x38xf32>
    %6 = tpu.matmul %1, %3, %cst {dimension_numbers = #tpu.dot_dimension_numbers<[1], [1], [0], [0], [0, 0, 1, 0], [], []>} : vector<16x64xf32>, vector<38x64xf32>, vector<16x38xf32> -> vector<16x38xf32>
    %cst_11 = arith.constant 1.250000e-01 : f32
    %7 = vector.broadcast %cst_11 : f32 to vector<16x38xf32>
    %8 = arith.mulf %6, %7 : vector<16x38xf32>
    %cst_12 = arith.constant dense<0xFF800000> : vector<16xf32>
    %9 = vector.multi_reduction <maximumf>, %8, %cst_12 [1] : vector<16x38xf32> to vector<16xf32>
    %10 = vector.shape_cast %9 : vector<16xf32> to vector<16x1xf32>
    %11 = vector.broadcast %10 : vector<16x1xf32> to vector<16x38xf32>
    %12 = arith.subf %8, %11 : vector<16x38xf32>
    %13 = math.exp %12 : vector<16x38xf32>
    %cst_13 = arith.constant dense<0.000000e+00> : vector<16xf32>
    %14 = vector.multi_reduction <add>, %13, %cst_13 [1] : vector<16x38xf32> to vector<16xf32>
    %15 = vector.shape_cast %14 : vector<16xf32> to vector<16x1xf32>
    %16 = tpu.reciprocal %15 : vector<16x1xf32> -> vector<16x1xf32>
    %17 = vector.broadcast %16 : vector<16x1xf32> to vector<16x38xf32>
    %18 = arith.mulf %13, %17 : vector<16x38xf32>
    %cst_14 = arith.constant dense<0.000000e+00> : vector<16x64xf32>
    %19 = tpu.matmul %18, %5, %cst_14 {dimension_numbers = #tpu.dot_dimension_numbers<[1], [0], [0], [1], [0, 0, 1, 1], [], []>} : vector<16x38xf32>, vector<38x64xf32>, vector<16x64xf32> -> vector<16x64xf32>
    %c0_15 = arith.constant 0 : index
    %c1 = arith.constant 1 : index
    %c0_16 = arith.constant 0 : index
    %c0_17 = arith.constant 0 : index
    %20 = vector.load %arg3[%c0_15, %c1, %c0_16, %c0_17] : memref<1x2x16x64xf32, #tpu.memory_space<vmem>>, vector<1x1x16x64xf32>
    %21 = vector.shape_cast %20 : vector<1x1x16x64xf32> to vector<16x64xf32>
    %c0_18 = arith.constant 0 : index
    %c1_19 = arith.constant 1 : index
    %c0_20 = arith.constant 0 : index
    %c0_21 = arith.constant 0 : index
    %22 = vector.load %arg4[%c0_18, %c1_19, %c0_20, %c0_21] : memref<1x2x38x64xf32, #tpu.memory_space<vmem>>, vector<1x1x38x64xf32>
    %23 = vector.shape_cast %22 : vector<1x1x38x64xf32> to vector<38x64xf32>
    %c0_22 = arith.constant 0 : index
    %c1_23 = arith.constant 1 : index
    %c0_24 = arith.constant 0 : index
    %c0_25 = arith.constant 0 : index
    %24 = vector.load %arg5[%c0_22, %c1_23, %c0_24, %c0_25] : memref<1x2x38x64xf32, #tpu.memory_space<vmem>>, vector<1x1x38x64xf32>
    %25 = vector.shape_cast %24 : vector<1x1x38x64xf32> to vector<38x64xf32>
    %cst_26 = arith.constant dense<0.000000e+00> : vector<16x38xf32>
    %26 = tpu.matmul %21, %23, %cst_26 {dimension_numbers = #tpu.dot_dimension_numbers<[1], [1], [0], [0], [0, 0, 1, 0], [], []>} : vector<16x64xf32>, vector<38x64xf32>, vector<16x38xf32> -> vector<16x38xf32>
    %cst_27 = arith.constant 1.250000e-01 : f32
    %27 = vector.broadcast %cst_27 : f32 to vector<16x38xf32>
    %28 = arith.mulf %26, %27 : vector<16x38xf32>
    %cst_28 = arith.constant dense<0xFF800000> : vector<16xf32>
    %29 = vector.multi_reduction <maximumf>, %28, %cst_28 [1] : vector<16x38xf32> to vector<16xf32>
    %30 = vector.shape_cast %29 : vector<16xf32> to vector<16x1xf32>
    %31 = vector.broadcast %30 : vector<16x1xf32> to vector<16x38xf32>
    %32 = arith.subf %28, %31 : vector<16x38xf32>
    %33 = math.exp %32 : vector<16x38xf32>
    %cst_29 = arith.constant dense<0.000000e+00> : vector<16xf32>
    %34 = vector.multi_reduction <add>, %33, %cst_29 [1] : vector<16x38xf32> to vector<16xf32>
    %35 = vector.shape_cast %34 : vector<16xf32> to vector<16x1xf32>
    %36 = tpu.reciprocal %35 : vector<16x1xf32> -> vector<16x1xf32>
    %37 = vector.broadcast %36 : vector<16x1xf32> to vector<16x38xf32>
    %38 = arith.mulf %33, %37 : vector<16x38xf32>
    %cst_30 = arith.constant dense<0.000000e+00> : vector<16x64xf32>
    %39 = tpu.matmul %38, %25, %cst_30 {dimension_numbers = #tpu.dot_dimension_numbers<[1], [0], [0], [1], [0, 0, 1, 1], [], []>} : vector<16x38xf32>, vector<38x64xf32>, vector<16x64xf32> -> vector<16x64xf32>
    %40 = tpu.concatenate %19, %39 in 1 : vector<16x64xf32>, vector<16x64xf32> -> vector<16x128xf32>
    %c0_31 = arith.constant 0 : index
    %c0_32 = arith.constant 0 : index
    %c0_33 = arith.constant 0 : index
    %41 = vector.load %arg6[%c0_31, %c0_32, %c0_33] : memref<1x16x128xf32, #tpu.memory_space<vmem>>, vector<1x16x128xf32>
    %42 = vector.shape_cast %41 : vector<1x16x128xf32> to vector<16x128xf32>
    %43 = vector.shape_cast %40 : vector<16x128xf32> to vector<1x16x128xf32>
    tpu.vector_store %arg6[%c0_31, %c0_32, %c0_33], %43 {strides = array<i32>} : memref<1x16x128xf32, #tpu.memory_space<vmem>>, vector<1x16x128xf32>,
    return
  }
  func.func @transform_0(%arg0: i32, %arg1: i32, %arg2: i32) -> (i32, i32, i32, i32) {
    %c0_i32 = arith.constant 0 : i32
    %c0_i32_0 = arith.constant 0 : i32
    return %arg0, %arg1, %arg2, %c0_i32 : i32, i32, i32, i32
  }
  func.func @transform_1(%arg0: i32, %arg1: i32, %arg2: i32) -> (i32, i32, i32, i32) {
    %c0_i32 = arith.constant 0 : i32
    %c0_i32_0 = arith.constant 0 : i32
    %c0_i32_1 = arith.constant 0 : i32
    return %arg0, %arg1, %c0_i32, %c0_i32_0 : i32, i32, i32, i32
  }
  func.func @transform_2(%arg0: i32, %arg1: i32, %arg2: i32) -> (i32, i32, i32, i32) {
    %c0_i32 = arith.constant 0 : i32
    %c0_i32_0 = arith.constant 0 : i32
    %c0_i32_1 = arith.constant 0 : i32
    return %arg0, %arg1, %c0_i32, %c0_i32_0 : i32, i32, i32, i32
  }
  func.func @transform_3(%arg0: i32, %arg1: i32, %arg2: i32) -> (i32, i32, i32) {
    %c0_i32 = arith.constant 0 : i32
    return %arg0, %arg2, %arg1 : i32, i32, i32
  }
}

</mosaic_0001>

<llo_original>
// kernel: tpu_custom_call.1
$region0: #{tpu_custom_call.1}
  #allocation0 [shape = 'u32[]', space=smem, size = 0x4, offset = 0x4, fixed_abs, tag = 'smem constant byte address 0x4 - core index']
  #allocation1 [shape = 'u32[144,128]{1,0:T(1,128)}', space=vmem, size = 0x12000, scoped, tag = 'internal scratch']
  %s0 = inlined_call_operand.vmem [shape: f32[2,4,48,64], index: 0, kind: input, shape index: {}]
  %s1 = inlined_call_operand.vmem [shape: f32[2,4,38,64], index: 1, kind: input, shape index: {}]
  %s2 = inlined_call_operand.vmem [shape: f32[2,4,38,64], index: 2, kind: input, shape index: {}]
  %s3 = inlined_call_operand.hbm [shape: f32[2,48,256], index: 3, kind: output, shape index: {}]
  %s4 = sld [smem:[#allocation0]]
  $region83: #{tpu_custom_call.1} parent=0
    _
  %s6 = ssub.s32 1, %s4
  %s7 = scalar_select 0, %s6, %s4
  $region1: #{tpu_custom_call.1} parent=0
    #allocation2 [shape = 'u8[32768]{0}', space=vmem, size = 0x8000, scoped, tag = 'input window, operand 0']
    #allocation3 [shape = 'u8[16384]{0}', space=vmem, size = 0x4000, scoped, tag = 'output window, operand 0']
    #allocation4 [shape = 's32[2]{0}', space=sflag, size = 0x8, scoped, tag = 'scoped memory for tpu_custom_call.1']
    %8 = vsyncpa [#allocation4], 0
    %s9 = scalar_lea.sflag [#allocation4], 1
    %10 = vsyncpa %s9, 0
    loop: start=0, step=1, limit=14
    $region2: #{tpu_custom_call.1} parent=1 // loop_pre_header
      _
    $region3: #{tpu_custom_call.1} parent=1 // loop_header
      %s12 = sphi 0, %s16
      %p13 = scmp.ge.s32.totalorder %s12, 14
      %s19 = sphi 0, %s38
      %s20 = sphi 0, %s34
      %s21 = sphi 0, %s30
      %s22 = sphi 0, %s19
      %s23 = sphi 0, %s20
      %s24 = sphi 0, %s21
      %s25 = sphi 0, %s22
      %s26 = sphi 0, %s23
      %s27 = sphi 0, %s24
      %s45 = sphi 0, %s47
      %s48 = sphi 0, %s45
      %s49 = sphi 0, %s48
      %s65 = sphi 0, %s49
      %s73 = sphi 0, %s75
      %s76 = sphi 0, %s73
      %s77 = sphi 0, %s76
      %s93 = sphi 0, %s77
      %s101 = sphi 0, %s103
      %s104 = sphi 0, %s101
      %s105 = sphi 0, %s104
      %s121 = sphi 0, %s105
      %s131 = sphi 0, %s133
      %s134 = sphi 0, %s131
      %s135 = sphi 0, %s134
      %s151 = sphi 0, %s135
    $region4: #{tpu_custom_call.1} parent=1 // loop_header_branch
      %15 = sbr.rel (%p13) target = $region8
    $region5: #{tpu_custom_call.1} parent=1 // loop_body
      %s17 = ssub.s32 %s12, 1
      %s18 = ssub.s32 %s12, 2
      %s28 = sadd.s32 1, %s21
      %p29 = scmp.ge.s32.totalorder %s28, 3
      %s30 = scalar_select %p29, 0, %s28
      %s31 = sadd.s32 1, %s20
      %s32 = scalar_select %p29, %s31, %s20
      %p33 = scmp.ge.s32.totalorder %s32, 2
      %s34 = scalar_select %p33, 0, %s32
      %s35 = sadd.s32 1, %s19
      %s36 = scalar_select %p33, %s35, %s19
      %p37 = scmp.ge.s32.totalorder %s36, 2
      %s38 = scalar_select %p37, 0, %s36
      %s39 = ssub.s32 %s19, %s38
      %s40 = ssub.s32 %s20, %s34
      %s41 = sor.u32 %s39, %s40
      %s42 = ssub.s32 %s21, %s30
      %s43 = sor.u32 %s41, %s42
      %p44 = scmp.eq.s32.totalorder %s43, 0
      %s46 = sadd.s32 %s45, 1
      %s47 = scalar_select %p44, %s45, %s46
      %p50 = pneg %p44
      %p51 = scmp.eq.s32.totalorder %s12, 11
      %p52 = por %p50, %p51
      %p53 = scmp.ne.s32.totalorder %s45, %s48
      %p54 = scmp.eq.s32.totalorder %s12, 0
      %p55 = por %p53, %p54
      %p56 = scmp.ne.s32.totalorder %s45, %s48
      %p57 = scmp.eq.s32.totalorder %s17, 11
      %p58 = por %p56, %p57
      %p59 = scmp.ne.s32.totalorder %s48, %s49
      %p60 = scmp.eq.s32.totalorder %s17, 0
      %p61 = por %p59, %p60
      %p62 = scmp.ne.s32.totalorder %s48, %s49
      %p63 = scmp.eq.s32.totalorder %s18, 11
      %p64 = por %p62, %p63
      %p66 = scmp.ne.s32.totalorder %s49, %s65
      %p67 = scmp.eq.s32.totalorder %s18, 0
      %p68 = por %p66, %p67
      %s69 = ssub.s32 %s19, %s38
      %s70 = ssub.s32 %s20, %s34
      %s71 = sor.u32 %s69, %s70
      %p72 = scmp.eq.s32.totalorder %s71, 0
      %s74 = sadd.s32 %s73, 1
      %s75 = scalar_select %p72, %s73, %s74
      %p78 = pneg %p72
      %p79 = scmp.eq.s32.totalorder %s12, 11
      %p80 = por %p78, %p79
      %p81 = scmp.ne.s32.totalorder %s73, %s76
      %p82 = scmp.eq.s32.totalorder %s12, 0
      %p83 = por %p81, %p82
      %p84 = scmp.ne.s32.totalorder %s73, %s76
      %p85 = scmp.eq.s32.totalorder %s17, 11
      %p86 = por %p84, %p85
      %p87 = scmp.ne.s32.totalorder %s76, %s77
      %p88 = scmp.eq.s32.totalorder %s17, 0
      %p89 = por %p87, %p88
      %p90 = scmp.ne.s32.totalorder %s76, %s77
      %p91 = scmp.eq.s32.totalorder %s18, 11
      %p92 = por %p90, %p91
      %p94 = scmp.ne.s32.totalorder %s77, %s93
      %p95 = scmp.eq.s32.totalorder %s18, 0
      %p96 = por %p94, %p95
      %s97 = ssub.s32 %s19, %s38
      %s98 = ssub.s32 %s20, %s34
      %s99 = sor.u32 %s97, %s98
      %p100 = scmp.eq.s32.totalorder %s99, 0
      %s102 = sadd.s32 %s101, 1
      %s103 = scalar_select %p100, %s101, %s102
      %p106 = pneg %p100
      %p107 = scmp.eq.s32.totalorder %s12, 11
      %p108 = por %p106, %p107
      %p109 = scmp.ne.s32.totalorder %s101, %s104
      %p110 = scmp.eq.s32.totalorder %s12, 0
      %p111 = por %p109, %p110
      %p112 = scmp.ne.s32.totalorder %s101, %s104
      %p113 = scmp.eq.s32.totalorder %s17, 11
      %p114 = por %p112, %p113
      %p115 = scmp.ne.s32.totalorder %s104, %s105
      %p116 = scmp.eq.s32.totalorder %s17, 0
      %p117 = por %p115, %p116
      %p118 = scmp.ne.s32.totalorder %s104, %s105
      %p119 = scmp.eq.s32.totalorder %s18, 11
      %p120 = por %p118, %p119
      %p122 = scmp.ne.s32.totalorder %s105, %s121
      %p123 = scmp.eq.s32.totalorder %s18, 0
      %p124 = por %p122, %p123
      %s125 = ssub.s32 %s19, %s38
      %s126 = ssub.s32 %s21, %s30
      %s127 = sor.u32 %s125, %s126
      %s128 = ssub.s32 %s20, %s34
      %s129 = sor.u32 %s127, %s128
      %p130 = scmp.eq.s32.totalorder %s129, 0
      %s132 = sadd.s32 %s131, 1
      %s133 = scalar_select %p130, %s131, %s132
      %p136 = pneg %p130
      %p137 = scmp.eq.s32.totalorder %s12, 11
      %p138 = por %p136, %p137
      %p139 = scmp.ne.s32.totalorder %s131, %s134
      %p140 = scmp.eq.s32.totalorder %s12, 0
      %p141 = por %p139, %p140
      %p142 = scmp.ne.s32.totalorder %s131, %s134
      %p143 = scmp.eq.s32.totalorder %s17, 11
      %p144 = por %p142, %p143
      %p145 = scmp.ne.s32.totalorder %s134, %s135
      %p146 = scmp.eq.s32.totalorder %s17, 0
      %p147 = por %p145, %p146
      %p148 = scmp.ne.s32.totalorder %s134, %s135
      %p149 = scmp.eq.s32.totalorder %s18, 11
      %p150 = por %p148, %p149
      %p152 = scmp.ne.s32.totalorder %s135, %s151
      %p153 = scmp.eq.s32.totalorder %s18, 0
      %p154 = por %p152, %p153
      %p155 = scmp.le.s32.totalorder 1, %s12
      %p156 = scmp.lt.s32.totalorder %s12, 13
      %p157 = pnand %p155, %p156
      %p158 = pneg %p157
      // Predicated region
      $region9: #{tpu_custom_call.1} parent=5 // pred_check
        _
      $region10: #{tpu_custom_call.1} parent=5 // pred_check_branch
        %160 = sbr.rel (%p157) target = $region12
      $region11: #{tpu_custom_call.1} parent=5 // pred_region
        %s161 = ssub.s32 %s12, 1
      $region12: #{tpu_custom_call.1} parent=5 // pred_fallthru
        _
      %p162 = scmp.lt.s32.totalorder %s12, 12
      // Predicated region
      $region13: #{tpu_custom_call.1} parent=5 // pred_check
        %p163 = pneg %p162
      $region14: #{tpu_custom_call.1} parent=5 // pred_check_branch
        %165 = sbr.rel (%p163) target = $region16
      $region15: #{tpu_custom_call.1} parent=5 // pred_region
        // Predicated region
        $region17: #{tpu_custom_call.1} parent=15 // pred_check
          %p166 = pneg %p55
        $region18: #{tpu_custom_call.1} parent=15 // pred_check_branch
          %168 = sbr.rel (%p166) target = $region20
        $region19: #{tpu_custom_call.1} parent=15 // pred_region
          %s169 = sand.u32 %s45, 1
          %s170 = sand.u32 %s45, 1
          %s171 = smul.addr %s170, 32
          %s172 = scalar_lea.vmem [#allocation2], %s171
          %s173 = smul.u32 2, %s20
          %s174 = smul.u32 2, %s21
          %s175 = smul.addr %s173, 6
          %s176 = sadd.s32 %s174, %s175
          %s177 = smul.addr %s19, 24
          %s178 = sadd.s32 %s176, %s177
          %s179 = smul.addr %s178, 8
          %s180 = scalar_lea.vmem %s0, %s179
          // Predicated region
          $region21: #{tpu_custom_call.1} parent=19 // pred_check
            _
          $region22: #{tpu_custom_call.1} parent=19 // pred_check_branch
            %182 = sbr.rel (0) target = $region24
          $region23: #{tpu_custom_call.1} parent=19 // pred_region
            // Predicated region
            $region25: #{tpu_custom_call.1} parent=23 // pred_check
              _
            $region26: #{tpu_custom_call.1} parent=23 // pred_check_branch
              %184 = sbr.rel (0) target = $region28
            $region27: #{tpu_custom_call.1} parent=23 // pred_region
              // Predicated region
              $region40: #{tpu_custom_call.1} parent=27 // pred_check
                _
              $region41: #{tpu_custom_call.1} parent=27 // pred_check_branch
                %206 = sbr.rel (0) target = $region43
              $region42: #{tpu_custom_call.1} parent=27 // pred_region
                loop: start=0, step=1, limit=1
                $region44: #{tpu_custom_call.1} parent=42 // loop_pre_header
                  _
                $region45: #{tpu_custom_call.1} parent=42 // loop_header
                  %s208 = sphi 0, %s212
                  %p209 = scmp.ge.s32.totalorder %s208, 1
                  %s213 = sphi %s180, %s180
                  %s214 = sphi %s172, %s172
                $region46: #{tpu_custom_call.1} parent=42 // loop_header_branch
                  %211 = sbr.rel (%p209) target = $region50
                $region47: #{tpu_custom_call.1} parent=42 // loop_body
                  %v215 = vld [vmem:[%s213] sm:$0xff]
                  %216 = vst [vmem:[%s214] sm:$0xff] %v215
                  %v217 = vld [vmem:[%s213 + $0x8] sm:$0xff]
                  %218 = vst [vmem:[%s214 + $0x8] sm:$0xff] %v217
                  %v219 = vld [vmem:[%s213 + $0x30] sm:$0xff]
                  %220 = vst [vmem:[%s214 + $0x10] sm:$0xff] %v219
                  %v221 = vld [vmem:[%s213 + $0x38] sm:$0xff]
                  %222 = vst [vmem:[%s214 + $0x18] sm:$0xff] %v221
                $region48: #{tpu_custom_call.1} parent=42 // loop_footer
                  %s212 = sadd.s32 1, %s208
                $region49: #{tpu_custom_call.1} parent=42 // loop_footer_branch
                  %207 = sbr.rel target = $region45
                $region50: #{tpu_custom_call.1} parent=42 // loop_exit
                  _
              $region43: #{tpu_custom_call.1} parent=27 // pred_fallthru
                _
              // Predicated region
              $region51: #{tpu_custom_call.1} parent=27 // pred_check
                _
              $region52: #{tpu_custom_call.1} parent=27 // pred_check_branch
                %224 = sbr.rel target = $region54
              $region53: #{tpu_custom_call.1} parent=27 // pred_region
                _
              $region54: #{tpu_custom_call.1} parent=27 // pred_fallthru
                _
            $region28: #{tpu_custom_call.1} parent=23 // pred_fallthru
              _
            // Predicated region
            $region29: #{tpu_custom_call.1} parent=23 // pred_check
              _
            $region30: #{tpu_custom_call.1} parent=23 // pred_check_branch
              %186 = sbr.rel target = $region32
            $region31: #{tpu_custom_call.1} parent=23 // pred_region
              %s188 = ssub.s32 256, 1
              loop: start=0, step=1, limit=1
              $region33: #{tpu_custom_call.1} parent=31 // loop_pre_header
                _
              $region34: #{tpu_custom_call.1} parent=31 // loop_header
                %s190 = sphi 0, %s194
                %p191 = scmp.ge.s32.totalorder %s190, 1
                %s195 = sphi %s180, %s180
                %s196 = sphi %s172, %s172
              $region35: #{tpu_custom_call.1} parent=31 // loop_header_branch
                %193 = sbr.rel (%p191) target = $region39
              $region36: #{tpu_custom_call.1} parent=31 // loop_body
                %v197 = vld [vmem:[%s195] sm:%s188]
                %198 = vst [vmem:[%s196] sm:%s188] %v197
                %v199 = vld [vmem:[%s195 + $0x8] sm:%s188]
                %200 = vst [vmem:[%s196 + $0x8] sm:%s188] %v199
                %v201 = vld [vmem:[%s195 + $0x30] sm:%s188]
                %202 = vst [vmem:[%s196 + $0x10] sm:%s188] %v201
                %v203 = vld [vmem:[%s195 + $0x38] sm:%s188]
                %204 = vst [vmem:[%s196 + $0x18] sm:%s188] %v203
              $region37: #{tpu_custom_call.1} parent=31 // loop_footer
                %s194 = sadd.s32 1, %s190
              $region38: #{tpu_custom_call.1} parent=31 // loop_footer_branch
                %189 = sbr.rel target = $region34
              $region39: #{tpu_custom_call.1} parent=31 // loop_exit
                _
            $region32: #{tpu_custom_call.1} parent=23 // pred_fallthru
              _
          $region24: #{tpu_custom_call.1} parent=19 // pred_fallthru
            _
          %225 = vnop
        $region20: #{tpu_custom_call.1} parent=15 // pred_fallthru
          _
        // Predicated region
        $region55: #{tpu_custom_call.1} parent=15 // pred_check
          %p226 = pneg %p83
        $region56: #{tpu_custom_call.1} parent=15 // pred_check_branch
          %228 = sbr.rel (%p226) target = $region58
        $region57: #{tpu_custom_call.1} parent=15 // pred_region
          %s229 = smul.u32 2, %s20
          %p230 = scmp.lt.s32.totalorder %s19, 1
          %s231 = scalar_select %p230, %s19, 1
          %p232 = scmp.lt.s32.totalorder %s229, 3
          %s233 = scalar_select %p232, %s229, 3
          %s234 = smul.addr %s233, 5
          %s235 = smul.addr %s231, 20
          %s236 = sadd.s32 %s234, %s235
          %s237 = smul.addr %s236, 8
          %s238 = scalar_lea.vmem %s1, %s237
          %s239 = smul.u32 2, %s20
        $region58: #{tpu_custom_call.1} parent=15 // pred_fallthru
          _
        // Predicated region
        $region59: #{tpu_custom_call.1} parent=15 // pred_check
          %p240 = pneg %p111
        $region60: #{tpu_custom_call.1} parent=15 // pred_check_branch
          %242 = sbr.rel (%p240) target = $region62
        $region61: #{tpu_custom_call.1} parent=15 // pred_region
          %s243 = smul.u32 2, %s20
          %p244 = scmp.lt.s32.totalorder %s19, 1
          %s245 = scalar_select %p244, %s19, 1
          %p246 = scmp.lt.s32.totalorder %s243, 3
          %s247 = scalar_select %p246, %s243, 3
          %s248 = smul.addr %s247, 5
          %s249 = smul.addr %s245, 20
          %s250 = sadd.s32 %s248, %s249
          %s251 = smul.addr %s250, 8
          %s252 = scalar_lea.vmem %s2, %s251
          %s253 = smul.u32 2, %s20
        $region62: #{tpu_custom_call.1} parent=15 // pred_fallthru
          _
      $region16: #{tpu_custom_call.1} parent=5 // pred_fallthru
        _
      %p254 = scmp.le.s32.totalorder 1, %s12
      %p255 = scmp.lt.s32.totalorder %s12, 13
      %p256 = pnand %p254, %p255
      %p257 = pneg %p256
      // Predicated region
      $region63: #{tpu_custom_call.1} parent=5 // pred_check
        _
      $region64: #{tpu_custom_call.1} parent=5 // pred_check_branch
        %259 = sbr.rel (%p256) target = $region66
      $region65: #{tpu_custom_call.1} parent=5 // pred_region
        %s260 = ssub.s32 %s12, 1
        %s261 = sand.u32 %s48, 1
        %s262 = sand.u32 %s48, 1
        %s263 = smul.addr %s262, 32
        %s264 = scalar_lea.vmem [#allocation2], %s263
        // Predicated region
        $region67: #{tpu_custom_call.1} parent=65 // pred_check
          %p265 = pneg %p61
        $region68: #{tpu_custom_call.1} parent=65 // pred_check_branch
          %267 = sbr.rel (%p265) target = $region70
        $region69: #{tpu_custom_call.1} parent=65 // pred_region
          _
        $region70: #{tpu_custom_call.1} parent=65 // pred_fallthru
          _
        %s268 = sand.u32 %s48, 1
        %s269 = sand.u32 %s48, 1
        %s270 = smul.addr %s269, 32
        %s271 = scalar_lea.vmem [#allocation2], %s270
        %p272 = pneg %p61
        %p273 = pneg %p58
        %s274 = smul.u32 2, %s23
        %p275 = scmp.lt.s32.totalorder %s22, 1
        %s276 = scalar_select %p275, %s22, 1
        %p277 = scmp.lt.s32.totalorder %s274, 3
        %s278 = scalar_select %p277, %s274, 3
        %s279 = smul.addr %s278, 5
        %s280 = smul.addr %s276, 20
        %s281 = sadd.s32 %s279, %s280
        %s282 = smul.addr %s281, 8
        %s283 = scalar_lea.vmem %s1, %s282
        %p284 = pneg %p89
        %p285 = pneg %p86
        %s286 = smul.u32 2, %s23
        %p287 = scmp.lt.s32.totalorder %s22, 1
        %s288 = scalar_select %p287, %s22, 1
        %p289 = scmp.lt.s32.totalorder %s286, 3
        %s290 = scalar_select %p289, %s286, 3
        %s291 = smul.addr %s290, 5
        %s292 = smul.addr %s288, 20
        %s293 = sadd.s32 %s291, %s292
        %s294 = smul.addr %s293, 8
        %s295 = scalar_lea.vmem %s2, %s294
        %p296 = pneg %p117
        %p297 = pneg %p114
        %p298 = pneg %p147
        %p299 = pneg %p144
        %s300 = sand.u32 %s134, 1
        %s301 = scalar_lea.sflag [#allocation4], %s300
        %s302 = sand.u32 %s134, 1
        %s303 = smul.addr %s302, 16
        %s304 = scalar_lea.vmem [#allocation3], %s303
        %s305 = smul.u32 2, %s23
        %s306 = smul.u32 2, %s24
        %s307 = smul.u32 2, %s23
        %p308 = scmp.lt.s32.totalorder %s22, 1
        %s309 = scalar_select %p308, %s22, 1
        %p310 = scmp.lt.s32.totalorder %s307, 3
        %s311 = scalar_select %p310, %s307, 3
        %s312 = smul.addr %s311, 5
        %s313 = smul.addr %s309, 20
        %s314 = sadd.s32 %s312, %s313
        %s315 = smul.addr %s314, 8
        %s316 = scalar_lea.vmem %s1, %s315
        %s317 = smul.u32 2, %s23
        %s318 = smul.u32 2, %s23
        %p319 = scmp.lt.s32.totalorder %s22, 1
        %s320 = scalar_select %p319, %s22, 1
        %p321 = scmp.lt.s32.totalorder %s318, 3
        %s322 = scalar_select %p321, %s318, 3
        %s323 = smul.addr %s322, 5
        %s324 = smul.addr %s320, 20
        %s325 = sadd.s32 %s323, %s324
        %s326 = smul.addr %s325, 8
        %s327 = scalar_lea.vmem %s2, %s326
        %s328 = smul.u32 2, %s23
        %s329 = smul.u32 2, %s24
        %v330 = vld [vmem:[%s264] sm:$0xff]
        %v331 = vld [vmem:[%s264 + $0x8] sm:$0xff]
        %v332 = vld [vmem:[%s316] sm:$0xff]
        %v333 = vld [vmem:[%s316 + $0x8] sm:$0xff]
        %v334 = vld [vmem:[%s316 + $0x10] sm:$0xff]
        %v335 = vld [vmem:[%s316 + $0x18] sm:$0xff]
        %v336 = vld [vmem:[%s316 + $0x20] sm:$0x3f]
        %v337 = vld [vmem:[%s327] sm:$0xff]
        %v338 = vld [vmem:[%s327 + $0x8] sm:$0xff]
        %v339 = vld [vmem:[%s327 + $0x10] sm:$0xff]
        %v340 = vld [vmem:[%s327 + $0x18] sm:$0xff]
        %v341 = vld [vmem:[%s327 + $0x20] sm:$0x3f]
        %vm342 = vcmask 523264
        %v344 = vsel %vm342, %v330, 0
        %v347 = vsel %vm342, %v331, 0
        %v350 = vsel %vm342, %v332, 0
        %v353 = vsel %vm342, %v333, 0
        %v356 = vsel %vm342, %v334, 0
        %v359 = vsel %vm342, %v335, 0
        %v362 = vsel %vm342, %v336, 0
        %364 = vmatprep.subr.mxu0 0.0
        %365 = vmatpush1.xpose.msra.mxu0 0.0
        %366 = vmatprep.subr.mxu0 0.0
        %367 = vmatpush1.xpose.msra.mxu0 0.0
        %368 = vmatprep.subr.mxu0 0.0
        %369 = vmatpush1.xpose.msra.mxu0 0.0
        %370 = vmatprep.subr.mxu0 0.0
        %371 = vmatpush1.xpose.msra.mxu0 0.0
        %372 = vmatprep.subr.mxu0 0.0
        %373 = vmatpush1.xpose.msra.mxu0 0.0
        %374 = vmatprep.subr.mxu0 0.0
        %375 = vmatpush1.xpose.msra.mxu0 0.0
        %376 = vmatprep.subr.mxu0 0.0
        %377 = vmatpush1.xpose.msra.mxu0 0.0
        %378 = vmatprep.subr.mxu0 0.0
        %379 = vmatpush1.xpose.msra.mxu0 0.0
        %380 = vmatprep.subr.mxu0 0.0
        %381 = vmatpush1.xpose.msra.mxu0 0.0
        %382 = vmatprep.subr.mxu0 0.0
        %383 = vmatpush1.xpose.msra.mxu0 0.0
        %384 = vmatprep.subr.mxu0 0.0
        %385 = vmatpush1.xpose.msra.mxu0 0.0
        %386 = vmatprep.subr.mxu0 0.0
        %387 = vmatpush1.xpose.msra.mxu0 %v362
        %388 = vmatprep.subr.mxu0 0.0
        %389 = vmatpush1.xpose.msra.mxu0 %v359
        %390 = vmatprep.subr.mxu0 0.0
        %391 = vmatpush1.xpose.msra.mxu0 %v356
        %392 = vmatprep.subr.mxu0 0.0
        %393 = vmatpush1.xpose.msra.mxu0 %v353
        %394 = vmatprep.subr.mxu0 0.0
        %395 = vmatpush1.xpose.msra.mxu0 %v350
        %396 = vmatprep.subr.mxu0 0.0
        %397 = vmatpush2.xpose.msra.mxu0 0.0
        %398 = vmatprep.subr.mxu0 0.0
        %399 = vmatpush2.xpose.msra.mxu0 0.0
        %400 = vmatprep.subr.mxu0 0.0
        %401 = vmatpush2.xpose.msra.mxu0 0.0
        %402 = vmatprep.subr.mxu0 0.0
        %403 = vmatpush2.xpose.msra.mxu0 0.0
        %404 = vmatprep.subr.mxu0 0.0
        %405 = vmatpush2.xpose.msra.mxu0 0.0
        %406 = vmatprep.subr.mxu0 0.0
        %407 = vmatpush2.xpose.msra.mxu0 0.0
        %408 = vmatprep.subr.mxu0 0.0
        %409 = vmatpush2.xpose.msra.mxu0 0.0
        %410 = vmatprep.subr.mxu0 0.0
        %411 = vmatpush2.xpose.msra.mxu0 0.0
        %412 = vmatprep.subr.mxu0 0.0
        %413 = vmatpush2.xpose.msra.mxu0 0.0
        %414 = vmatprep.subr.mxu0 0.0
        %415 = vmatpush2.xpose.msra.mxu0 0.0
        %416 = vmatprep.subr.mxu0 0.0
        %417 = vmatpush2.xpose.msra.mxu0 0.0
        %418 = vmatprep.subr.mxu0 0.0
        %419 = vmatpush2.xpose.msra.mxu0 0.0
        %420 = vmatprep.subr.mxu0 0.0
        %421 = vmatpush2.xpose.msra.mxu0 0.0
        %422 = vmatprep.subr.mxu0 0.0
        %423 = vmatpush2.xpose.msra.mxu0 0.0
        %424 = vmatprep.subr.mxu0 0.0
        %425 = vmatpush2.xpose.msra.mxu0 0.0
        %426 = vmatprep.subr.mxu0 0.0
        %427 = vmatpush2.xpose.msra.mxu0 0.0
        %428 = vmatprep.mubr.f32.mxu0 0.0
        %429 = vmatmul.mubr.f32.gmra.mxu0 %v344
        %v430 = vpop.f32.mrf.mxu0
        %v431 = vadd.f32 0.0, %v430
        %v432 = vpop.f32.mrf.mxu0
        %433 = vmatprep.mubr.f32.mxu0 0.0
        %434 = vmatmul.mubr.f32.gmra.mxu0 %v347
        %v435 = vpop.f32.mrf.mxu0
        %v436 = vadd.f32 0.0, %v435
        %v437 = vpop.f32.mrf.mxu0
        %438 = vdwg.mxu0
        %v439 = vmul.f32 %v431, 0.125
        %v440 = vmul.f32 %v436, 0.125
        %vm441 = vcmask 310272
        %v442 = vsel %vm441, %v439, -inf
        %443 = vmax.xlane.f32.xlu0 %v442
        %v444 = vpop.xlane.xlu0 %443
        %v445 = vsel %vm441, %v440, -inf
        %446 = vmax.xlane.f32.xlu0 %v445
        %v447 = vpop.xlane.xlu0 %446
        %v448 = vsub.f32 %v439, %v444
        %v449 = vsub.f32 %v440, %v447
        %v450 = vmul.f32 %v448, 1.442695
        %v451 = vpow.pop %v450
        %v452 = vmul.f32 %v449, 1.442695
        %v453 = vpow.pop %v452
        %v454 = vsel %vm441, %v451, 0.0
        %455 = vadd.xlane.f32.xlu0 %v454
        %v456 = vpop.xlane.xlu0 %455
        %v457 = vsel %vm441, %v453, 0.0
        %458 = vadd.xlane.f32.xlu0 %v457
        %v459 = vpop.xlane.xlu0 %458
        %v460 = vrcp.pop %v456
        %v461 = vrcp.pop %v459
        %v462 = vmul.f32 %v451, %v460
        %v463 = vmul.f32 %v453, %v461
        %v465 = vsel %vm441, %v462, 0
        %v468 = vsel %vm441, %v463, 0
        %vm470 = vcmask 1045504
        %v472 = vsel %vm470, %v341, 0
        %474 = vmatprep.subr.mxu0 0.0
        %475 = vmatpush1.msra.mxu0 0.0
        %476 = vmatprep.subr.mxu0 0.0
        %477 = vmatpush1.msra.mxu0 0.0
        %478 = vmatprep.subr.mxu0 0.0
        %479 = vmatpush1.msra.mxu0 0.0
        %480 = vmatprep.subr.mxu0 0.0
        %481 = vmatpush1.msra.mxu0 0.0
        %482 = vmatprep.subr.mxu0 0.0
        %483 = vmatpush1.msra.mxu0 0.0
        %484 = vmatprep.subr.mxu0 0.0
        %485 = vmatpush1.msra.mxu0 0.0
        %486 = vmatprep.subr.mxu0 0.0
        %487 = vmatpush1.msra.mxu0 0.0
        %488 = vmatprep.subr.mxu0 0.0
        %489 = vmatpush1.msra.mxu0 0.0
        %490 = vmatprep.subr.mxu0 0.0
        %491 = vmatpush1.msra.mxu0 0.0
        %492 = vmatprep.subr.mxu0 0.0
        %493 = vmatpush1.msra.mxu0 0.0
        %494 = vmatprep.subr.mxu0 0.0
        %495 = vmatpush1.msra.mxu0 0.0
        %496 = vmatprep.subr.mxu0 0.0
        %497 = vmatpush1.msra.mxu0 %v472
        %498 = vmatprep.subr.mxu0 0.0
        %499 = vmatpush1.msra.mxu0 %v340
        %500 = vmatprep.subr.mxu0 0.0
        %501 = vmatpush1.msra.mxu0 %v339
        %502 = vmatprep.subr.mxu0 0.0
        %503 = vmatpush1.msra.mxu0 %v338
        %504 = vmatprep.subr.mxu0 0.0
        %505 = vmatpush1.msra.mxu0 %v337
        %506 = vmatprep.subr.mxu0 0.0
        %507 = vmatpush2.msra.mxu0 0.0
        %508 = vmatprep.subr.mxu0 0.0
        %509 = vmatpush2.msra.mxu0 0.0
        %510 = vmatprep.subr.mxu0 0.0
        %511 = vmatpush2.msra.mxu0 0.0
        %512 = vmatprep.subr.mxu0 0.0
        %513 = vmatpush2.msra.mxu0 0.0
        %514 = vmatprep.subr.mxu0 0.0
        %515 = vmatpush2.msra.mxu0 0.0
        %516 = vmatprep.subr.mxu0 0.0
        %517 = vmatpush2.msra.mxu0 0.0
        %518 = vmatprep.subr.mxu0 0.0
        %519 = vmatpush2.msra.mxu0 0.0
        %520 = vmatprep.subr.mxu0 0.0
        %521 = vmatpush2.msra.mxu0 0.0
        %522 = vmatprep.subr.mxu0 0.0
        %523 = vmatpush2.msra.mxu0 0.0
        %524 = vmatprep.subr.mxu0 0.0
        %525 = vmatpush2.msra.mxu0 0.0
        %526 = vmatprep.subr.mxu0 0.0
        %527 = vmatpush2.msra.mxu0 0.0
        %528 = vmatprep.subr.mxu0 0.0
        %529 = vmatpush2.msra.mxu0 0.0
        %530 = vmatprep.subr.mxu0 0.0
        %531 = vmatpush2.msra.mxu0 0.0
        %532 = vmatprep.subr.mxu0 0.0
        %533 = vmatpush2.msra.mxu0 0.0
        %534 = vmatprep.subr.mxu0 0.0
        %535 = vmatpush2.msra.mxu0 0.0
        %536 = vmatprep.subr.mxu0 0.0
        %537 = vmatpush2.msra.mxu0 0.0
        %538 = vmatprep.mubr.f32.mxu0 0.0
        %539 = vmatmul.mubr.f32.gmra.mxu0 %v465
        %v540 = vpop.f32.mrf.mxu0
        %v541 = vadd.f32 0.0, %v540
        %v542 = vpop.f32.mrf.mxu0
        %543 = vmatprep.mubr.f32.mxu0 0.0
        %544 = vmatmul.mubr.f32.gmra.mxu0 %v468
        %v545 = vpop.f32.mrf.mxu0
        %v546 = vadd.f32 0.0, %v545
        %v547 = vpop.f32.mrf.mxu0
        %548 = vdwg.mxu0
        %s549 = scalar_lea.vmem %s264, 16 [#allocation2]
        %v550 = vld [vmem:[%s549] sm:$0xff]
        %v551 = vld [vmem:[%s549 + $0x8] sm:$0xff]
        %s552 = scalar_lea.vmem %s316, 40
        %v553 = vld [vmem:[%s552] sm:$0xff]
        %v554 = vld [vmem:[%s552 + $0x8] sm:$0xff]
        %v555 = vld [vmem:[%s552 + $0x10] sm:$0xff]
        %v556 = vld [vmem:[%s552 + $0x18] sm:$0xff]
        %v557 = vld [vmem:[%s552 + $0x20] sm:$0x3f]
        %s558 = scalar_lea.vmem %s327, 40
        %v559 = vld [vmem:[%s558] sm:$0xff]
        %v560 = vld [vmem:[%s558 + $0x8] sm:$0xff]
        %v561 = vld [vmem:[%s558 + $0x10] sm:$0xff]
        %v562 = vld [vmem:[%s558 + $0x18] sm:$0xff]
        %v563 = vld [vmem:[%s558 + $0x20] sm:$0x3f]
        %v565 = vsel %vm342, %v550, 0
        %v568 = vsel %vm342, %v551, 0
        %v571 = vsel %vm342, %v553, 0
        %v574 = vsel %vm342, %v554, 0
        %v577 = vsel %vm342, %v555, 0
        %v580 = vsel %vm342, %v556, 0
        %v583 = vsel %vm342, %v557, 0
        %585 = vmatprep.subr.mxu0 0.0
        %586 = vmatpush1.xpose.msra.mxu0 0.0
        %587 = vmatprep.subr.mxu0 0.0
        %588 = vmatpush1.xpose.msra.mxu0 0.0
        %589 = vmatprep.subr.mxu0 0.0
        %590 = vmatpush1.xpose.msra.mxu0 0.0
        %591 = vmatprep.subr.mxu0 0.0
        %592 = vmatpush1.xpose.msra.mxu0 0.0
        %593 = vmatprep.subr.mxu0 0.0
        %594 = vmatpush1.xpose.msra.mxu0 0.0
        %595 = vmatprep.subr.mxu0 0.0
        %596 = vmatpush1.xpose.msra.mxu0 0.0
        %597 = vmatprep.subr.mxu0 0.0
        %598 = vmatpush1.xpose.msra.mxu0 0.0
        %599 = vmatprep.subr.mxu0 0.0
        %600 = vmatpush1.xpose.msra.mxu0 0.0
        %601 = vmatprep.subr.mxu0 0.0
        %602 = vmatpush1.xpose.msra.mxu0 0.0
        %603 = vmatprep.subr.mxu0 0.0
        %604 = vmatpush1.xpose.msra.mxu0 0.0
        %605 = vmatprep.subr.mxu0 0.0
        %606 = vmatpush1.xpose.msra.mxu0 0.0
        %607 = vmatprep.subr.mxu0 0.0
        %608 = vmatpush1.xpose.msra.mxu0 %v583
        %609 = vmatprep.subr.mxu0 0.0
        %610 = vmatpush1.xpose.msra.mxu0 %v580
        %611 = vmatprep.subr.mxu0 0.0
        %612 = vmatpush1.xpose.msra.mxu0 %v577
        %613 = vmatprep.subr.mxu0 0.0
        %614 = vmatpush1.xpose.msra.mxu0 %v574
        %615 = vmatprep.subr.mxu0 0.0
        %616 = vmatpush1.xpose.msra.mxu0 %v571
        %617 = vmatprep.subr.mxu0 0.0
        %618 = vmatpush2.xpose.msra.mxu0 0.0
        %619 = vmatprep.subr.mxu0 0.0
        %620 = vmatpush2.xpose.msra.mxu0 0.0
        %621 = vmatprep.subr.mxu0 0.0
        %622 = vmatpush2.xpose.msra.mxu0 0.0
        %623 = vmatprep.subr.mxu0 0.0
        %624 = vmatpush2.xpose.msra.mxu0 0.0
        %625 = vmatprep.subr.mxu0 0.0
        %626 = vmatpush2.xpose.msra.mxu0 0.0
        %627 = vmatprep.subr.mxu0 0.0
        %628 = vmatpush2.xpose.msra.mxu0 0.0
        %629 = vmatprep.subr.mxu0 0.0
        %630 = vmatpush2.xpose.msra.mxu0 0.0
        %631 = vmatprep.subr.mxu0 0.0
        %632 = vmatpush2.xpose.msra.mxu0 0.0
        %633 = vmatprep.subr.mxu0 0.0
        %634 = vmatpush2.xpose.msra.mxu0 0.0
        %635 = vmatprep.subr.mxu0 0.0
        %636 = vmatpush2.xpose.msra.mxu0 0.0
        %637 = vmatprep.subr.mxu0 0.0
        %638 = vmatpush2.xpose.msra.mxu0 0.0
        %639 = vmatprep.subr.mxu0 0.0
        %640 = vmatpush2.xpose.msra.mxu0 0.0
        %641 = vmatprep.subr.mxu0 0.0
        %642 = vmatpush2.xpose.msra.mxu0 0.0
        %643 = vmatprep.subr.mxu0 0.0
        %644 = vmatpush2.xpose.msra.mxu0 0.0
        %645 = vmatprep.subr.mxu0 0.0
        %646 = vmatpush2.xpose.msra.mxu0 0.0
        %647 = vmatprep.subr.mxu0 0.0
        %648 = vmatpush2.xpose.msra.mxu0 0.0
        %649 = vmatprep.mubr.f32.mxu0 0.0
        %650 = vmatmul.mubr.f32.gmra.mxu0 %v565
        %v651 = vpop.f32.mrf.mxu0
        %v652 = vadd.f32 0.0, %v651
        %v653 = vpop.f32.mrf.mxu0
        %654 = vmatprep.mubr.f32.mxu0 0.0
        %655 = vmatmul.mubr.f32.gmra.mxu0 %v568
        %v656 = vpop.f32.mrf.mxu0
        %v657 = vadd.f32 0.0, %v656
        %v658 = vpop.f32.mrf.mxu0
        %659 = vdwg.mxu0
        %v660 = vmul.f32 %v652, 0.125
        %v661 = vmul.f32 %v657, 0.125
        %v662 = vsel %vm441, %v660, -inf
        %663 = vmax.xlane.f32.xlu0 %v662
        %v664 = vpop.xlane.xlu0 %663
        %v665 = vsel %vm441, %v661, -inf
        %666 = vmax.xlane.f32.xlu0 %v665
        %v667 = vpop.xlane.xlu0 %666
        %v668 = vsub.f32 %v660, %v664
        %v669 = vsub.f32 %v661, %v667
        %v670 = vmul.f32 %v668, 1.442695
        %v671 = vpow.pop %v670
        %v672 = vmul.f32 %v669, 1.442695
        %v673 = vpow.pop %v672
        %v674 = vsel %vm441, %v671, 0.0
        %675 = vadd.xlane.f32.xlu0 %v674
        %v676 = vpop.xlane.xlu0 %675
        %v677 = vsel %vm441, %v673, 0.0
        %678 = vadd.xlane.f32.xlu0 %v677
        %v679 = vpop.xlane.xlu0 %678
        %v680 = vrcp.pop %v676
        %v681 = vrcp.pop %v679
        %v682 = vmul.f32 %v671, %v680
        %v683 = vmul.f32 %v673, %v681
        %v685 = vsel %vm441, %v682, 0
        %v688 = vsel %vm441, %v683, 0
        %v691 = vsel %vm470, %v563, 0
        %693 = vmatprep.subr.mxu0 0.0
        %694 = vmatpush1.msra.mxu0 0.0
        %695 = vmatprep.subr.mxu0 0.0
        %696 = vmatpush1.msra.mxu0 0.0
        %697 = vmatprep.subr.mxu0 0.0
        %698 = vmatpush1.msra.mxu0 0.0
        %699 = vmatprep.subr.mxu0 0.0
        %700 = vmatpush1.msra.mxu0 0.0
        %701 = vmatprep.subr.mxu0 0.0
        %702 = vmatpush1.msra.mxu0 0.0
        %703 = vmatprep.subr.mxu0 0.0
        %704 = vmatpush1.msra.mxu0 0.0
        %705 = vmatprep.subr.mxu0 0.0
        %706 = vmatpush1.msra.mxu0 0.0
        %707 = vmatprep.subr.mxu0 0.0
        %708 = vmatpush1.msra.mxu0 0.0
        %709 = vmatprep.subr.mxu0 0.0
        %710 = vmatpush1.msra.mxu0 0.0
        %711 = vmatprep.subr.mxu0 0.0
        %712 = vmatpush1.msra.mxu0 0.0
        %713 = vmatprep.subr.mxu0 0.0
        %714 = vmatpush1.msra.mxu0 0.0
        %715 = vmatprep.subr.mxu0 0.0
        %716 = vmatpush1.msra.mxu0 %v691
        %717 = vmatprep.subr.mxu0 0.0
        %718 = vmatpush1.msra.mxu0 %v562
        %719 = vmatprep.subr.mxu0 0.0
        %720 = vmatpush1.msra.mxu0 %v561
        %721 = vmatprep.subr.mxu0 0.0
        %722 = vmatpush1.msra.mxu0 %v560
        %723 = vmatprep.subr.mxu0 0.0
        %724 = vmatpush1.msra.mxu0 %v559
        %725 = vmatprep.subr.mxu0 0.0
        %726 = vmatpush2.msra.mxu0 0.0
        %727 = vmatprep.subr.mxu0 0.0
        %728 = vmatpush2.msra.mxu0 0.0
        %729 = vmatprep.subr.mxu0 0.0
        %730 = vmatpush2.msra.mxu0 0.0
        %731 = vmatprep.subr.mxu0 0.0
        %732 = vmatpush2.msra.mxu0 0.0
        %733 = vmatprep.subr.mxu0 0.0
        %734 = vmatpush2.msra.mxu0 0.0
        %735 = vmatprep.subr.mxu0 0.0
        %736 = vmatpush2.msra.mxu0 0.0
        %737 = vmatprep.subr.mxu0 0.0
        %738 = vmatpush2.msra.mxu0 0.0
        %739 = vmatprep.subr.mxu0 0.0
        %740 = vmatpush2.msra.mxu0 0.0
        %741 = vmatprep.subr.mxu0 0.0
        %742 = vmatpush2.msra.mxu0 0.0
        %743 = vmatprep.subr.mxu0 0.0
        %744 = vmatpush2.msra.mxu0 0.0
        %745 = vmatprep.subr.mxu0 0.0
        %746 = vmatpush2.msra.mxu0 0.0
        %747 = vmatprep.subr.mxu0 0.0
        %748 = vmatpush2.msra.mxu0 0.0
        %749 = vmatprep.subr.mxu0 0.0
        %750 = vmatpush2.msra.mxu0 0.0
        %751 = vmatprep.subr.mxu0 0.0
        %752 = vmatpush2.msra.mxu0 0.0
        %753 = vmatprep.subr.mxu0 0.0
        %754 = vmatpush2.msra.mxu0 0.0
        %755 = vmatprep.subr.mxu0 0.0
        %756 = vmatpush2.msra.mxu0 0.0
        %757 = vmatprep.mubr.f32.mxu0 0.0
        %758 = vmatmul.mubr.f32.gmra.mxu0 %v685
        %v759 = vpop.f32.mrf.mxu0
        %v760 = vadd.f32 0.0, %v759
        %v761 = vpop.f32.mrf.mxu0
        %762 = vmatprep.mubr.f32.mxu0 0.0
        %763 = vmatmul.mubr.f32.gmra.mxu0 %v688
        %v764 = vpop.f32.mrf.mxu0
        %v765 = vadd.f32 0.0, %v764
        %v766 = vpop.f32.mrf.mxu0
        %767 = vdwg.mxu0
        %770 = vrot.lane.b32.xlu0 %v760, 64
        %v771 = vpop.permute.xlu0 %770
        %772 = vrot.lane.b32.xlu0 %v765, 64
        %v773 = vpop.permute.xlu0 %772
        %v776 = vsel %vm342, %v541, %v771
        %v777 = vsel %vm342, %v546, %v773
        %778 = vst [vmem:[%s304] sm:$0xff] %v776
        %779 = vst [vmem:[%s304 + $0x8] sm:$0xff] %v777
        %s780 = sand.u32 %s134, 1
        %s781 = scalar_lea.sflag [#allocation4], %s780
        %s782 = sand.u32 %s134, 1
        %s783 = smul.addr %s782, 16
        %s784 = scalar_lea.vmem [#allocation3], %s783
        // Predicated region
        $region71: #{tpu_custom_call.1} parent=65 // pred_check
          %p785 = pneg %p144
        $region72: #{tpu_custom_call.1} parent=65 // pred_check_branch
          %787 = sbr.rel (%p785) target = $region74
        $region73: #{tpu_custom_call.1} parent=65 // pred_region
          %s788 = smul.u32 2, %s24
          %s790 = ssub.s32 256, 256
          %791 = vsyncadd %s781, %s790
          %s792 = smul.addr %s788, 2
          %s793 = sadd.s32 %s23, %s792
          %s794 = smul.addr %s22, 12
          %s795 = sadd.s32 %s793, %s794
          %s796 = smul.addr %s795, 128
          %s797 = scalar_lea.hbm %s3, %s796
          %s798 = sshll.u32 %s784, 4
          %s799 = int_to_ptr.vmem [resolvable:$true] %s798
          %804 = dma.vmem_to_hbm [thread:$0]  %s799, 256, %s797, %s781, 128, 256, 8
        $region74: #{tpu_custom_call.1} parent=65 // pred_fallthru
          _
      $region66: #{tpu_custom_call.1} parent=5 // pred_fallthru
        _
      %p805 = scmp.le.s32.totalorder 2, %s12
      // Predicated region
      $region75: #{tpu_custom_call.1} parent=5 // pred_check
        %p806 = pneg %p805
      $region76: #{tpu_custom_call.1} parent=5 // pred_check_branch
        %808 = sbr.rel (%p806) target = $region78
      $region77: #{tpu_custom_call.1} parent=5 // pred_region
        %s809 = ssub.s32 %s12, 2
        // Predicated region
        $region79: #{tpu_custom_call.1} parent=77 // pred_check
          %p810 = pneg %p150
        $region80: #{tpu_custom_call.1} parent=77 // pred_check_branch
          %812 = sbr.rel (%p810) target = $region82
        $region81: #{tpu_custom_call.1} parent=77 // pred_region
          %s813 = sand.u32 %s135, 1
          %s814 = scalar_lea.sflag [#allocation4], %s813
          %s815 = sand.u32 %s135, 1
          %s816 = smul.addr %s815, 16
          %s817 = scalar_lea.vmem [#allocation3], %s816
          %818 = dma.done %s814, 256
        $region82: #{tpu_custom_call.1} parent=77 // pred_fallthru
          _
      $region78: #{tpu_custom_call.1} parent=5 // pred_fallthru
        _
    $region6: #{tpu_custom_call.1} parent=1 // loop_footer
      %s16 = sadd.s32 1, %s12
    $region7: #{tpu_custom_call.1} parent=1 // loop_footer_branch
      %11 = sbr.rel target = $region3
    $region8: #{tpu_custom_call.1} parent=1 // loop_exit
      _
    %819 = vsyncpa [#allocation4], 1
    %s820 = scalar_lea.sflag [#allocation4], 1
    %821 = vsyncpa %s820, 1

</llo_original>
